<compile_context>
chip_gen: v7x
topology: tpu7x:2x2x1
jax: 0.10.0
libtpu: 0.0.40
codegen_flags: <defaults>
</compile_context>

<pallas_src>
import jax
import jax.numpy as jnp
from jax.experimental import pallas as pl
from jax.experimental.pallas import tpu as pltpu


def _round_up(v, m):
    return (v + m - 1) // m * m


def make_resk1_kernel(n_layers, nclass):
    """Build the fused RESK1 kernel for a fixed layer count / class count."""

    def kernel(*refs):
        # refs = [x, adj, W0, b0, W1, b1, ..., W_{L-1}, b_{L-1}, out]
        x_ref, adj_ref = refs[0], refs[1]
        out_ref = refs[-1]
        wb = refs[2:-1]

        adj = adj_ref[...]  # bf16 (Np, Np), loaded once, reused by every layer

        def gcn(h, w_ref, b_ref):
            # GraphConvolution: adj @ (h @ W) + b   (bf16 operands, f32 accum)
            support = jnp.dot(h.astype(jnp.bfloat16), w_ref[...],
                              preferred_element_type=jnp.float32)
            agg = jnp.dot(adj, support.astype(jnp.bfloat16),
                          preferred_element_type=jnp.float32)
            return agg + b_ref[...]

        # first layer: relu(gc0(x, adj))
        h = jnp.maximum(gcn(x_ref[...], wb[0], wb[1]), 0.0)

        # middle layers: residual blocks  h = relu(gc(h, adj)) + h
        for l in range(1, n_layers - 1):
            h = jnp.maximum(gcn(h, wb[2 * l], wb[2 * l + 1]), 0.0) + h

        # last layer (no relu), then log_softmax over the valid class columns
        logits = gcn(h, wb[2 * (n_layers - 1)], wb[2 * (n_layers - 1) + 1])

        col = jax.lax.broadcasted_iota(jnp.int32, logits.shape, 1)
        valid = col < nclass                       # padded class cols masked out
        masked = jnp.where(valid, logits, jnp.float32(-1e30))
        m = jnp.max(masked, axis=1, keepdims=True)
        e = jnp.where(valid, jnp.exp(masked - m), 0.0)
        lse = jnp.log(jnp.sum(e, axis=1, keepdims=True)) + m
        out_ref[...] = (logits - lse).astype(out_ref.dtype)

    return kernel


def resk1_pallas(x, adj, weights, biases, nclass):
    """Fused RESK1 forward. x: (N, nfeat) f32, adj: (N, N) f32 (dense, normalized)."""
    N, nfeat = x.shape
    n_layers = len(weights)
    assert n_layers >= 3, "RESK1 needs at least 3 layers"

    # Lane-dense padding: channel dims -> multiple of 128, rows -> multiple of 8.
    N_pad = _round_up(N, 8)
    dims = [nfeat] + [w.shape[1] for w in weights]           # per-layer in/out dims
    dims_pad = [_round_up(d, 128) for d in dims]

    x_p = jnp.zeros((N_pad, dims_pad[0]), jnp.bfloat16)
    x_p = x_p.at[:N, :nfeat].set(x.astype(jnp.bfloat16))
    adj_p = jnp.zeros((N_pad, N_pad), jnp.bfloat16)
    adj_p = adj_p.at[:N, :N].set(adj.astype(jnp.bfloat16))

    wb_inputs = []
    for l, (w, b) in enumerate(zip(weights, biases)):
        din, dout = w.shape
        w_p = jnp.zeros((dims_pad[l], dims_pad[l + 1]), jnp.bfloat16)
        w_p = w_p.at[:din, :dout].set(w.astype(jnp.bfloat16))
        b_p = jnp.zeros((1, dims_pad[l + 1]), jnp.float32)
        b_p = b_p.at[0, :dout].set(b.astype(jnp.float32))
        wb_inputs += [w_p, b_p]

    C_pad = dims_pad[-1]
    kernel = make_resk1_kernel(n_layers, nclass)

    vmem = pl.BlockSpec(memory_space=pltpu.MemorySpace.VMEM)
    n_inputs = 2 + 2 * n_layers

    # Explicit VMEM budget: inputs + output + f32 activation temporaries, with headroom.
    in_bytes = sum(int(a.size) * a.dtype.itemsize for a in [x_p, adj_p] + wb_inputs)
    out_bytes = N_pad * C_pad * 4
    act_bytes = 4 * N_pad * max(dims_pad) * 4
    vmem_limit = int(min(max(2 * (in_bytes + out_bytes) + act_bytes, 8 << 20), 64 << 20))

    out_p = pl.pallas_call(
        kernel,
        out_shape=jax.ShapeDtypeStruct((N_pad, C_pad), jnp.float32),
        in_specs=[vmem] * n_inputs,
        out_specs=vmem,
        compiler_params=pltpu.CompilerParams(vmem_limit_bytes=vmem_limit),
    )(x_p, adj_p, *wb_inputs)

    # Slice away lane/sublane padding.
    return out_p[:N, :nclass]


def resk1_reference(x, adj, weights, biases):
    """Pure-JAX fp32 reference mirroring the PyTorch forward (eval mode)."""
    h = jax.nn.relu(adj @ (x @ weights[0]) + biases[0])
    for w, b in zip(weights[1:-1], biases[1:-1]):
        h = jax.nn.relu(adj @ (h @ w) + b) + h
    logits = adj @ (h @ weights[-1]) + biases[-1]
    return jax.nn.log_softmax(logits, axis=1)


def init_params(key, nfeat, nhid, nclass, nlayers):
    """Kipf GraphConvolution init: uniform(-stdv, stdv), stdv = 1/sqrt(out_features)."""
    dims_in = [nfeat] + [nhid] * (nlayers - 1)
    dims_out = [nhid] * (nlayers - 1) + [nclass]
    keys = jax.random.split(key, 2 * nlayers)
    weights, biases = [], []
    for l, (din, dout) in enumerate(zip(dims_in, dims_out)):
        stdv = 1.0 / jnp.sqrt(jnp.asarray(dout, jnp.float32))
        weights.append(jax.random.uniform(keys[2 * l], (din, dout), jnp.float32, -stdv, stdv))
        biases.append(jax.random.uniform(keys[2 * l + 1], (dout,), jnp.float32, -stdv, stdv))
    return weights, biases


if __name__ == "__main__":
    # Small shapes consistent with the module: a graph of 64 nodes,
    # nfeat=96 input features, nhid=64 hidden, nclass=7, nlayers=4
    # (first layer + 2 residual blocks + classifier).
    N, nfeat, nhid, nclass, nlayers = 64, 96, 64, 7, 4

    key = jax.random.PRNGKey(0)
    kx, ka, kp = jax.random.split(key, 3)

    x = jax.random.normal(kx, (N, nfeat), jnp.float32)

    # Dense row-normalized adjacency with self-loops.
    a = jax.random.uniform(ka, (N, N), jnp.float32)
    a = (a > 0.6).astype(jnp.float32) + jnp.eye(N, dtype=jnp.float32)
    adj = a / jnp.sum(a, axis=1, keepdims=True)

    weights, biases = init_params(kp, nfeat, nhid, nclass, nlayers)

    out = resk1_pallas(x, adj, weights, biases, nclass)
    out = jax.block_until_ready(out)

    ref = resk1_reference(x, adj, weights, biases)

    assert out.shape == (N, nclass) and out.dtype == jnp.float32
    # bf16 MXU operands (f32 accumulation) -> relaxed tolerance vs the fp32 reference.
    assert jnp.allclose(out, ref, atol=5e-2, rtol=5e-2), (
        "Pallas output mismatch vs reference; max abs err = %g"
        % float(jnp.max(jnp.abs(out - ref))))

    print("KERNEL_OK")
</pallas_src>

<mosaic_0001>
module attributes {stable_mosaic.version = 11 : i64} {
  func.func @kernel(%arg0: memref<64x128xbf16, #tpu.memory_space<vmem>>, %arg1: memref<64x64xbf16, #tpu.memory_space<vmem>>, %arg2: memref<128x128xbf16, #tpu.memory_space<vmem>>, %arg3: memref<1x128xf32, #tpu.memory_space<vmem>>, %arg4: memref<128x128xbf16, #tpu.memory_space<vmem>>, %arg5: memref<1x128xf32, #tpu.memory_space<vmem>>, %arg6: memref<128x128xbf16, #tpu.memory_space<vmem>>, %arg7: memref<1x128xf32, #tpu.memory_space<vmem>>, %arg8: memref<128x128xbf16, #tpu.memory_space<vmem>>, %arg9: memref<1x128xf32, #tpu.memory_space<vmem>>, %arg10: memref<64x128xf32, #tpu.memory_space<vmem>>) attributes {dimension_semantics = [], scalar_prefetch = 0 : i64, scratch_operands = 0 : i64, tpu.core_type = #tpu.core_type<tc>} {
    %c0 = arith.constant 0 : index
    %c0_0 = arith.constant 0 : index
    %0 = vector.load %arg1[%c0, %c0_0] : memref<64x64xbf16, #tpu.memory_space<vmem>>, vector<64x64xbf16>
    %c0_1 = arith.constant 0 : index
    %c0_2 = arith.constant 0 : index
    %1 = vector.load %arg0[%c0_1, %c0_2] : memref<64x128xbf16, #tpu.memory_space<vmem>>, vector<64x128xbf16>
    %c0_3 = arith.constant 0 : index
    %c0_4 = arith.constant 0 : index
    %2 = vector.load %arg2[%c0_3, %c0_4] : memref<128x128xbf16, #tpu.memory_space<vmem>>, vector<128x128xbf16>
    %cst = arith.constant dense<0.000000e+00> : vector<64x128xf32>
    %3 = tpu.matmul %1, %2, %cst {dimension_numbers = #tpu.dot_dimension_numbers<[1], [0], [0], [1], [0, 0, 1, 1], [], []>} : vector<64x128xbf16>, vector<128x128xbf16>, vector<64x128xf32> -> vector<64x128xf32>
    %4 = arith.truncf %3 : vector<64x128xf32> to vector<64x128xbf16>
    %cst_5 = arith.constant dense<0.000000e+00> : vector<64x128xf32>
    %5 = tpu.matmul %0, %4, %cst_5 {dimension_numbers = #tpu.dot_dimension_numbers<[1], [0], [0], [1], [0, 0, 1, 1], [], []>} : vector<64x64xbf16>, vector<64x128xbf16>, vector<64x128xf32> -> vector<64x128xf32>
    %c0_6 = arith.constant 0 : index
    %c0_7 = arith.constant 0 : index
    %6 = vector.load %arg3[%c0_6, %c0_7] : memref<1x128xf32, #tpu.memory_space<vmem>>, vector<1x128xf32>
    %7 = vector.broadcast %6 : vector<1x128xf32> to vector<64x128xf32>
    %8 = arith.addf %5, %7 : vector<64x128xf32>
    %cst_8 = arith.constant 0.000000e+00 : f32
    %9 = vector.broadcast %cst_8 : f32 to vector<64x128xf32>
    %10 = arith.maximumf %8, %9 : vector<64x128xf32>
    %11 = arith.truncf %10 : vector<64x128xf32> to vector<64x128xbf16>
    %c0_9 = arith.constant 0 : index
    %c0_10 = arith.constant 0 : index
    %12 = vector.load %arg4[%c0_9, %c0_10] : memref<128x128xbf16, #tpu.memory_space<vmem>>, vector<128x128xbf16>
    %cst_11 = arith.constant dense<0.000000e+00> : vector<64x128xf32>
    %13 = tpu.matmul %11, %12, %cst_11 {dimension_numbers = #tpu.dot_dimension_numbers<[1], [0], [0], [1], [0, 0, 1, 1], [], []>} : vector<64x128xbf16>, vector<128x128xbf16>, vector<64x128xf32> -> vector<64x128xf32>
    %14 = arith.truncf %13 : vector<64x128xf32> to vector<64x128xbf16>
    %cst_12 = arith.constant dense<0.000000e+00> : vector<64x128xf32>
    %15 = tpu.matmul %0, %14, %cst_12 {dimension_numbers = #tpu.dot_dimension_numbers<[1], [0], [0], [1], [0, 0, 1, 1], [], []>} : vector<64x64xbf16>, vector<64x128xbf16>, vector<64x128xf32> -> vector<64x128xf32>
    %c0_13 = arith.constant 0 : index
    %c0_14 = arith.constant 0 : index
    %16 = vector.load %arg5[%c0_13, %c0_14] : memref<1x128xf32, #tpu.memory_space<vmem>>, vector<1x128xf32>
    %17 = vector.broadcast %16 : vector<1x128xf32> to vector<64x128xf32>
    %18 = arith.addf %15, %17 : vector<64x128xf32>
    %cst_15 = arith.constant 0.000000e+00 : f32
    %19 = vector.broadcast %cst_15 : f32 to vector<64x128xf32>
    %20 = arith.maximumf %18, %19 : vector<64x128xf32>
    %21 = arith.addf %20, %10 : vector<64x128xf32>
    %22 = arith.truncf %21 : vector<64x128xf32> to vector<64x128xbf16>
    %c0_16 = arith.constant 0 : index
    %c0_17 = arith.constant 0 : index
    %23 = vector.load %arg6[%c0_16, %c0_17] : memref<128x128xbf16, #tpu.memory_space<vmem>>, vector<128x128xbf16>
    %cst_18 = arith.constant dense<0.000000e+00> : vector<64x128xf32>
    %24 = tpu.matmul %22, %23, %cst_18 {dimension_numbers = #tpu.dot_dimension_numbers<[1], [0], [0], [1], [0, 0, 1, 1], [], []>} : vector<64x128xbf16>, vector<128x128xbf16>, vector<64x128xf32> -> vector<64x128xf32>
    %25 = arith.truncf %24 : vector<64x128xf32> to vector<64x128xbf16>
    %cst_19 = arith.constant dense<0.000000e+00> : vector<64x128xf32>
    %26 = tpu.matmul %0, %25, %cst_19 {dimension_numbers = #tpu.dot_dimension_numbers<[1], [0], [0], [1], [0, 0, 1, 1], [], []>} : vector<64x64xbf16>, vector<64x128xbf16>, vector<64x128xf32> -> vector<64x128xf32>
    %c0_20 = arith.constant 0 : index
    %c0_21 = arith.constant 0 : index
    %27 = vector.load %arg7[%c0_20, %c0_21] : memref<1x128xf32, #tpu.memory_space<vmem>>, vector<1x128xf32>
    %28 = vector.broadcast %27 : vector<1x128xf32> to vector<64x128xf32>
    %29 = arith.addf %26, %28 : vector<64x128xf32>
    %cst_22 = arith.constant 0.000000e+00 : f32
    %30 = vector.broadcast %cst_22 : f32 to vector<64x128xf32>
    %31 = arith.maximumf %29, %30 : vector<64x128xf32>
    %32 = arith.addf %31, %21 : vector<64x128xf32>
    %33 = arith.truncf %32 : vector<64x128xf32> to vector<64x128xbf16>
    %c0_23 = arith.constant 0 : index
    %c0_24 = arith.constant 0 : index
    %34 = vector.load %arg8[%c0_23, %c0_24] : memref<128x128xbf16, #tpu.memory_space<vmem>>, vector<128x128xbf16>
    %cst_25 = arith.constant dense<0.000000e+00> : vector<64x128xf32>
    %35 = tpu.matmul %33, %34, %cst_25 {dimension_numbers = #tpu.dot_dimension_numbers<[1], [0], [0], [1], [0, 0, 1, 1], [], []>} : vector<64x128xbf16>, vector<128x128xbf16>, vector<64x128xf32> -> vector<64x128xf32>
    %36 = arith.truncf %35 : vector<64x128xf32> to vector<64x128xbf16>
    %cst_26 = arith.constant dense<0.000000e+00> : vector<64x128xf32>
    %37 = tpu.matmul %0, %36, %cst_26 {dimension_numbers = #tpu.dot_dimension_numbers<[1], [0], [0], [1], [0, 0, 1, 1], [], []>} : vector<64x64xbf16>, vector<64x128xbf16>, vector<64x128xf32> -> vector<64x128xf32>
    %c0_27 = arith.constant 0 : index
    %c0_28 = arith.constant 0 : index
    %38 = vector.load %arg9[%c0_27, %c0_28] : memref<1x128xf32, #tpu.memory_space<vmem>>, vector<1x128xf32>
    %39 = vector.broadcast %38 : vector<1x128xf32> to vector<64x128xf32>
    %40 = arith.addf %37, %39 : vector<64x128xf32>
    %41 = tpu.iota {dimensions = array<i32: 1>} : vector<64x128xi32>
    %c7_i32 = arith.constant 7 : i32
    %42 = vector.broadcast %c7_i32 : i32 to vector<64x128xi32>
    %43 = arith.cmpi slt, %41, %42 : vector<64x128xi32>
    %cst_29 = arith.constant -1.000000e+30 : f32
    %44 = vector.broadcast %cst_29 : f32 to vector<64x128xf32>
    %45 = arith.select %43, %40, %44 : vector<64x128xi1>, vector<64x128xf32>
    %cst_30 = arith.constant dense<0xFF800000> : vector<64xf32>
    %46 = vector.multi_reduction <maximumf>, %45, %cst_30 [1] : vector<64x128xf32> to vector<64xf32>
    %47 = vector.shape_cast %46 : vector<64xf32> to vector<64x1xf32>
    %48 = vector.broadcast %47 : vector<64x1xf32> to vector<64x128xf32>
    %49 = arith.subf %45, %48 : vector<64x128xf32>
    %50 = math.exp %49 : vector<64x128xf32>
    %cst_31 = arith.constant 0.000000e+00 : f32
    %51 = vector.broadcast %cst_31 : f32 to vector<64x128xf32>
    %52 = arith.select %43, %50, %51 : vector<64x128xi1>, vector<64x128xf32>
    %cst_32 = arith.constant dense<0.000000e+00> : vector<64xf32>
    %53 = vector.multi_reduction <add>, %52, %cst_32 [1] : vector<64x128xf32> to vector<64xf32>
    %54 = vector.shape_cast %53 : vector<64xf32> to vector<64x1xf32>
    %55 = math.log %54 : vector<64x1xf32>
    %56 = arith.addf %55, %47 : vector<64x1xf32>
    %57 = vector.broadcast %56 : vector<64x1xf32> to vector<64x128xf32>
    %58 = arith.subf %40, %57 : vector<64x128xf32>
    %c0_33 = arith.constant 0 : index
    %c0_34 = arith.constant 0 : index
    %59 = vector.load %arg10[%c0_33, %c0_34] : memref<64x128xf32, #tpu.memory_space<vmem>>, vector<64x128xf32>
    tpu.vector_store %arg10[%c0_33, %c0_34], %58 {strides = array<i32>} : memref<64x128xf32, #tpu.memory_space<vmem>>, vector<64x128xf32>,
    return
  }
}

</mosaic_0001>

<llo_original>
// kernel: tpu_custom_call.1
$region0: #{tpu_custom_call.1}
  #allocation0 [shape = 'u32[]', space=smem, size = 0x4, offset = 0x4, fixed_abs, tag = 'smem constant byte address 0x4 - core index']
  #allocation1 [shape = 'u32[144,128]{1,0:T(1,128)}', space=vmem, size = 0x12000, scoped, tag = 'internal scratch']
  %s0 = inlined_call_operand.hbm [shape: bf16[64,128], index: 0, kind: input, shape index: {}]
  %s1 = inlined_call_operand.hbm [shape: bf16[64,64], index: 1, kind: input, shape index: {}]
  %s2 = inlined_call_operand.hbm [shape: bf16[128,128], index: 2, kind: input, shape index: {}]
  %s3 = inlined_call_operand.vmem [shape: f32[1,128], index: 3, kind: input, shape index: {}]
  %s4 = inlined_call_operand.hbm [shape: bf16[128,128], index: 4, kind: input, shape index: {}]
  %s5 = inlined_call_operand.vmem [shape: f32[1,128], index: 5, kind: input, shape index: {}]
  %s6 = inlined_call_operand.hbm [shape: bf16[128,128], index: 6, kind: input, shape index: {}]
  %s7 = inlined_call_operand.vmem [shape: f32[1,128], index: 7, kind: input, shape index: {}]
  %s8 = inlined_call_operand.hbm [shape: bf16[128,128], index: 8, kind: input, shape index: {}]
  %s9 = inlined_call_operand.vmem [shape: f32[1,128], index: 9, kind: input, shape index: {}]
  %s10 = inlined_call_operand.hbm [shape: f32[64,128], index: 10, kind: output, shape index: {}]
  %s11 = sld [smem:[#allocation0]]
  $region74: #{tpu_custom_call.1} parent=0
    _
  %s13 = ssub.s32 1, %s11
  %s14 = scalar_select 0, %s13, %s11
  $region1: #{tpu_custom_call.1} parent=0
    #allocation2 [shape = 'u8[16384]{0}', space=vmem, size = 0x4000, scoped, tag = 'input window, operand 0, single buffered']
    #allocation3 [shape = 's32[1]{0}', space=sflag, size = 0x4, scoped, tag = 'scoped memory for tpu_custom_call.1']
    #allocation4 [shape = 's32[1]{0}', space=sflag, size = 0x4, scoped, tag = 'scoped memory for tpu_custom_call.1']
    #allocation5 [shape = 'u8[16384]{0}', space=vmem, size = 0x4000, scoped, tag = 'input window, operand 1, single buffered']
    #allocation6 [shape = 's32[1]{0}', space=sflag, size = 0x4, scoped, tag = 'scoped memory for tpu_custom_call.1']
    #allocation7 [shape = 'u8[32768]{0}', space=vmem, size = 0x8000, scoped, tag = 'input window, operand 2, single buffered']
    #allocation8 [shape = 'u8[32768]{0}', space=vmem, size = 0x8000, scoped, tag = 'input window, operand 4, single buffered']
    #allocation9 [shape = 's32[1]{0}', space=sflag, size = 0x4, scoped, tag = 'scoped memory for tpu_custom_call.1']
    #allocation10 [shape = 'u8[32768]{0}', space=vmem, size = 0x8000, scoped, tag = 'input window, operand 6, single buffered']
    #allocation11 [shape = 'u8[32768]{0}', space=vmem, size = 0x8000, scoped, tag = 'input window, operand 8, single buffered']
    #allocation12 [shape = 's32[1]{0}', space=sflag, size = 0x4, scoped, tag = 'scoped memory for tpu_custom_call.1']
    #allocation13 [shape = 'u8[32768]{0}', space=vmem, size = 0x8000, scoped, tag = 'output window, operand 0, single buffered']
    %15 = vsyncpa [#allocation3], 0
    %16 = vsyncpa [#allocation6], 0
    %17 = vsyncpa [#allocation9], 0
    %18 = vsyncpa [#allocation12], 0
    %19 = vsyncpa [#allocation4], 0
    // Predicated region
    $region2: #{tpu_custom_call.1} parent=1 // pred_check
      _
    $region3: #{tpu_custom_call.1} parent=1 // pred_check_branch
      %21 = sbr.rel (0) target = $region5
    $region4: #{tpu_custom_call.1} parent=1 // pred_region
      %s23 = ssub.s32 512, 512
      %24 = vsyncadd [#allocation3], %s23
      %s25 = sshll.u32 [#allocation2], 4
      %s26 = int_to_ptr.vmem [resolvable:$true] %s25
      %31 = dma.hbm_to_vmem [thread:$0]  %s0, 512, %s26, [#allocation3], 64, 64, 4
    $region5: #{tpu_custom_call.1} parent=1 // pred_fallthru
      _
    // Predicated region
    $region6: #{tpu_custom_call.1} parent=1 // pred_check
      _
    $region7: #{tpu_custom_call.1} parent=1 // pred_check_branch
      %33 = sbr.rel (0) target = $region9
    $region8: #{tpu_custom_call.1} parent=1 // pred_region
      %s35 = ssub.s32 512, 512
      %36 = vsyncadd [#allocation6], %s35
      %s37 = sshll.u32 [#allocation5], 4
      %s38 = int_to_ptr.vmem [resolvable:$true] %s37
      %43 = dma.hbm_to_vmem [thread:$0]  %s1, 512, %s38, [#allocation6], 64, 64, 4
    $region9: #{tpu_custom_call.1} parent=1 // pred_fallthru
      _
    // Predicated region
    $region10: #{tpu_custom_call.1} parent=1 // pred_check
      _
    $region11: #{tpu_custom_call.1} parent=1 // pred_check_branch
      %45 = sbr.rel (0) target = $region13
    $region12: #{tpu_custom_call.1} parent=1 // pred_region
      %s47 = ssub.s32 1024, 1024
      %48 = vsyncadd [#allocation6], %s47
      %s49 = sshll.u32 [#allocation7], 4
      %s50 = int_to_ptr.vmem [resolvable:$true] %s49
      %55 = dma.hbm_to_vmem [thread:$0]  %s2, 1024, %s50, [#allocation6], 64, 64, 4
    $region13: #{tpu_custom_call.1} parent=1 // pred_fallthru
      _
    // Predicated region
    $region14: #{tpu_custom_call.1} parent=1 // pred_check
      _
    $region15: #{tpu_custom_call.1} parent=1 // pred_check_branch
      %57 = sbr.rel (0) target = $region17
    $region16: #{tpu_custom_call.1} parent=1 // pred_region
      _
    $region17: #{tpu_custom_call.1} parent=1 // pred_fallthru
      _
    // Predicated region
    $region18: #{tpu_custom_call.1} parent=1 // pred_check
      _
    $region19: #{tpu_custom_call.1} parent=1 // pred_check_branch
      %59 = sbr.rel (0) target = $region21
    $region20: #{tpu_custom_call.1} parent=1 // pred_region
      %s61 = ssub.s32 1024, 1024
      %62 = vsyncadd [#allocation9], %s61
      %s63 = sshll.u32 [#allocation8], 4
      %s64 = int_to_ptr.vmem [resolvable:$true] %s63
      %69 = dma.hbm_to_vmem [thread:$0]  %s4, 1024, %s64, [#allocation9], 64, 64, 4
    $region21: #{tpu_custom_call.1} parent=1 // pred_fallthru
      _
    // Predicated region
    $region22: #{tpu_custom_call.1} parent=1 // pred_check
      _
    $region23: #{tpu_custom_call.1} parent=1 // pred_check_branch
      %71 = sbr.rel (0) target = $region25
    $region24: #{tpu_custom_call.1} parent=1 // pred_region
      _
    $region25: #{tpu_custom_call.1} parent=1 // pred_fallthru
      _
    // Predicated region
    $region26: #{tpu_custom_call.1} parent=1 // pred_check
      _
    $region27: #{tpu_custom_call.1} parent=1 // pred_check_branch
      %73 = sbr.rel (0) target = $region29
    $region28: #{tpu_custom_call.1} parent=1 // pred_region
      %s75 = ssub.s32 1024, 1024
      %76 = vsyncadd [#allocation9], %s75
      %s77 = sshll.u32 [#allocation10], 4
      %s78 = int_to_ptr.vmem [resolvable:$true] %s77
      %83 = dma.hbm_to_vmem [thread:$0]  %s6, 1024, %s78, [#allocation9], 64, 64, 4
    $region29: #{tpu_custom_call.1} parent=1 // pred_fallthru
      _
    // Predicated region
    $region30: #{tpu_custom_call.1} parent=1 // pred_check
      _
    $region31: #{tpu_custom_call.1} parent=1 // pred_check_branch
      %85 = sbr.rel (0) target = $region33
    $region32: #{tpu_custom_call.1} parent=1 // pred_region
      _
    $region33: #{tpu_custom_call.1} parent=1 // pred_fallthru
      _
    // Predicated region
    $region34: #{tpu_custom_call.1} parent=1 // pred_check
      _
    $region35: #{tpu_custom_call.1} parent=1 // pred_check_branch
      %87 = sbr.rel (0) target = $region37
    $region36: #{tpu_custom_call.1} parent=1 // pred_region
      %s89 = ssub.s32 1024, 1024
      %90 = vsyncadd [#allocation12], %s89
      %s91 = sshll.u32 [#allocation11], 4
      %s92 = int_to_ptr.vmem [resolvable:$true] %s91
      %97 = dma.hbm_to_vmem [thread:$0]  %s8, 1024, %s92, [#allocation12], 64, 64, 4
    $region37: #{tpu_custom_call.1} parent=1 // pred_fallthru
      _
    // Predicated region
    $region38: #{tpu_custom_call.1} parent=1 // pred_check
      _
    $region39: #{tpu_custom_call.1} parent=1 // pred_check_branch
      %99 = sbr.rel (0) target = $region41
    $region40: #{tpu_custom_call.1} parent=1 // pred_region
      _
    $region41: #{tpu_custom_call.1} parent=1 // pred_fallthru
      _
    // Predicated region
    $region42: #{tpu_custom_call.1} parent=1 // pred_check
      _
    $region43: #{tpu_custom_call.1} parent=1 // pred_check_branch
      %101 = sbr.rel (0) target = $region45
    $region44: #{tpu_custom_call.1} parent=1 // pred_region
      %102 = dma.done [#allocation3], 512
    $region45: #{tpu_custom_call.1} parent=1 // pred_fallthru
      _
    // Predicated region
    $region46: #{tpu_custom_call.1} parent=1 // pred_check
      _
    $region47: #{tpu_custom_call.1} parent=1 // pred_check_branch
      %104 = sbr.rel (0) target = $region49
    $region48: #{tpu_custom_call.1} parent=1 // pred_region
      %105 = dma.done [#allocation6], 512
    $region49: #{tpu_custom_call.1} parent=1 // pred_fallthru
      _
    // Predicated region
    $region50: #{tpu_custom_call.1} parent=1 // pred_check
      _
    $region51: #{tpu_custom_call.1} parent=1 // pred_check_branch
      %107 = sbr.rel (0) target = $region53
    $region52: #{tpu_custom_call.1} parent=1 // pred_region
      %108 = dma.done [#allocation6], 1024
    $region53: #{tpu_custom_call.1} parent=1 // pred_fallthru
      _
    // Predicated region
    $region54: #{tpu_custom_call.1} parent=1 // pred_check
      _
    $region55: #{tpu_custom_call.1} parent=1 // pred_check_branch
      %110 = sbr.rel (0) target = $region57
    $region56: #{tpu_custom_call.1} parent=1 // pred_region
      %111 = dma.done [#allocation9], 1024
    $region57: #{tpu_custom_call.1} parent=1 // pred_fallthru
      _
    // Predicated region
    $region58: #{tpu_custom_call.1} parent=1 // pred_check
      _
    $region59: #{tpu_custom_call.1} parent=1 // pred_check_branch
      %113 = sbr.rel (0) target = $region61
    $region60: #{tpu_custom_call.1} parent=1 // pred_region
      %114 = dma.done [#allocation9], 1024
    $region61: #{tpu_custom_call.1} parent=1 // pred_fallthru
      _
    // Predicated region
    $region62: #{tpu_custom_call.1} parent=1 // pred_check
      _
    $region63: #{tpu_custom_call.1} parent=1 // pred_check_branch
      %116 = sbr.rel (0) target = $region65
    $region64: #{tpu_custom_call.1} parent=1 // pred_region
      %117 = dma.done [#allocation12], 1024
    $region65: #{tpu_custom_call.1} parent=1 // pred_fallthru
      _
    %v119 = vld [vmem:[#allocation5] sm:$0xf]
    %v120 = vld [vmem:[#allocation5 + $0x4] sm:$0xf]
    %v121 = vld [vmem:[#allocation5 + $0x8] sm:$0xf]
    %v122 = vld [vmem:[#allocation5 + $0xc] sm:$0xf]
    %v123 = vld [vmem:[#allocation5 + $0x10] sm:$0xf]
    %v124 = vld [vmem:[#allocation5 + $0x14] sm:$0xf]
    %v125 = vld [vmem:[#allocation5 + $0x18] sm:$0xf]
    %v126 = vld [vmem:[#allocation5 + $0x1c] sm:$0xf]
    %v127 = vld [vmem:[#allocation2] sm:$0xf]
    %v128 = vld [vmem:[#allocation2 + $0x4] sm:$0xf]
    %v129 = vld [vmem:[#allocation2 + $0x8] sm:$0xf]
    %v130 = vld [vmem:[#allocation2 + $0xc] sm:$0xf]
    %v131 = vld [vmem:[#allocation2 + $0x10] sm:$0xf]
    %v132 = vld [vmem:[#allocation2 + $0x14] sm:$0xf]
    %v133 = vld [vmem:[#allocation2 + $0x18] sm:$0xf]
    %v134 = vld [vmem:[#allocation2 + $0x1c] sm:$0xf]
    %v135 = vld [vmem:[#allocation7] sm:$0xf]
    %v136 = vld [vmem:[#allocation7 + $0x4] sm:$0xf]
    %v137 = vld [vmem:[#allocation7 + $0x8] sm:$0xf]
    %v138 = vld [vmem:[#allocation7 + $0xc] sm:$0xf]
    %v139 = vld [vmem:[#allocation7 + $0x10] sm:$0xf]
    %v140 = vld [vmem:[#allocation7 + $0x14] sm:$0xf]
    %v141 = vld [vmem:[#allocation7 + $0x18] sm:$0xf]
    %v142 = vld [vmem:[#allocation7 + $0x1c] sm:$0xf]
    %v143 = vld [vmem:[#allocation7 + $0x20] sm:$0xf]
    %v144 = vld [vmem:[#allocation7 + $0x24] sm:$0xf]
    %v145 = vld [vmem:[#allocation7 + $0x28] sm:$0xf]
    %v146 = vld [vmem:[#allocation7 + $0x2c] sm:$0xf]
    %v147 = vld [vmem:[#allocation7 + $0x30] sm:$0xf]
    %v148 = vld [vmem:[#allocation7 + $0x34] sm:$0xf]
    %v149 = vld [vmem:[#allocation7 + $0x38] sm:$0xf]
    %v150 = vld [vmem:[#allocation7 + $0x3c] sm:$0xf]
    %v159 = vunpack.c.l.b16 %v127
    %v160 = vunpack.c.l.b16 %v128
    %v161 = vunpack.c.l.b16 %v129
    %v162 = vunpack.c.l.b16 %v130
    %v163 = vunpack.c.l.b16 %v131
    %v164 = vunpack.c.l.b16 %v132
    %v165 = vunpack.c.l.b16 %v133
    %v166 = vunpack.c.l.b16 %v134
    %v167 = vpack.c.b16 %v160, %v159
    %v168 = vpack.c.b16 %v162, %v161
    %v169 = vpack.c.b16 %v164, %v163
    %v170 = vpack.c.b16 %v166, %v165
    %v191 = vunpack.c.l.b16 %v135
    %v192 = vunpack.c.l.b16 %v136
    %v193 = vunpack.c.l.b16 %v137
    %v194 = vunpack.c.l.b16 %v138
    %v195 = vunpack.c.l.b16 %v139
    %v196 = vunpack.c.l.b16 %v140
    %v197 = vunpack.c.l.b16 %v141
    %v198 = vunpack.c.l.b16 %v142
    %v199 = vunpack.c.l.b16 %v143
    %v200 = vunpack.c.l.b16 %v144
    %v201 = vunpack.c.l.b16 %v145
    %v202 = vunpack.c.l.b16 %v146
    %v203 = vunpack.c.l.b16 %v147
    %v204 = vunpack.c.l.b16 %v148
    %v205 = vunpack.c.l.b16 %v149
    %v206 = vunpack.c.l.b16 %v150
    %v207 = vpack.c.b16 %v192, %v191
    %v208 = vpack.c.b16 %v194, %v193
    %v209 = vpack.c.b16 %v196, %v195
    %v210 = vpack.c.b16 %v198, %v197
    %v211 = vpack.c.b16 %v200, %v199
    %v212 = vpack.c.b16 %v202, %v201
    %v213 = vpack.c.b16 %v204, %v203
    %v214 = vpack.c.b16 %v206, %v205
    %223 = vmatprep.subr.bf16.mxu0 0
    %224 = vmatpush1.bf16.msra.mxu0 %v207
    %225 = vmatprep.subr.bf16.mxu0 0
    %226 = vmatpush1.bf16.msra.mxu0 %v208
    %227 = vmatprep.subr.bf16.mxu0 0
    %228 = vmatpush1.bf16.msra.mxu0 %v209
    %229 = vmatprep.subr.bf16.mxu0 0
    %230 = vmatpush1.bf16.msra.mxu0 %v210
    %231 = vmatprep.subr.bf16.mxu0 0
    %232 = vmatpush1.bf16.msra.mxu0 %v211
    %233 = vmatprep.subr.bf16.mxu0 0
    %234 = vmatpush1.bf16.msra.mxu0 %v212
    %235 = vmatprep.subr.bf16.mxu0 0
    %236 = vmatpush1.bf16.msra.mxu0 %v213
    %237 = vmatprep.subr.bf16.mxu0 0
    %238 = vmatpush1.bf16.msra.mxu0 %v214
    %239 = vmatprep.subr.bf16.mxu0 0
    %240 = vmatpush1.bf16.msra.mxu0 0
    %241 = vmatprep.subr.bf16.mxu0 0
    %242 = vmatpush1.bf16.msra.mxu0 0
    %243 = vmatprep.subr.bf16.mxu0 0
    %244 = vmatpush1.bf16.msra.mxu0 0
    %245 = vmatprep.subr.bf16.mxu0 0
    %246 = vmatpush1.bf16.msra.mxu0 0
    %247 = vmatprep.subr.bf16.mxu0 0
    %248 = vmatpush1.bf16.msra.mxu0 0
    %249 = vmatprep.subr.bf16.mxu0 0
    %250 = vmatpush1.bf16.msra.mxu0 0
    %251 = vmatprep.subr.bf16.mxu0 0
    %252 = vmatpush1.bf16.msra.mxu0 0
    %253 = vmatprep.subr.bf16.mxu0 0
    %254 = vmatpush1.bf16.msra.mxu0 0
    %255 = vmatprep.mubr.bf16.mxu0 0
    %256 = vmatmul.mubr.bf16.gmra.mrb[0].mxu0 %v167
    %v257 = vpop.f32.mrb[0].mxu0
    %v258 = vadd.f32 0.0, %v257
    %v259 = vpop.f32.mrb[0].mxu0
    %v260 = vpop.f32.mrb[0].mxu0
    %v261 = vadd.f32 0.0, %v260
    %v262 = vpop.f32.mrb[0].mxu0
    %263 = vmatprep.mubr.bf16.mxu0 0
    %264 = vmatmul.mubr.bf16.gmra.mrb[0].mxu0 %v168
    %v265 = vpop.f32.mrb[0].mxu0
    %v266 = vadd.f32 0.0, %v265
    %v267 = vpop.f32.mrb[0].mxu0
    %v268 = vpop.f32.mrb[0].mxu0
    %v269 = vadd.f32 0.0, %v268
    %v270 = vpop.f32.mrb[0].mxu0
    %271 = vmatprep.mubr.bf16.mxu0 0
    %272 = vmatmul.mubr.bf16.gmra.mrb[0].mxu0 %v169
    %v273 = vpop.f32.mrb[0].mxu0
    %v274 = vadd.f32 0.0, %v273
    %v275 = vpop.f32.mrb[0].mxu0
    %v276 = vpop.f32.mrb[0].mxu0
    %v277 = vadd.f32 0.0, %v276
    %v278 = vpop.f32.mrb[0].mxu0
    %279 = vmatprep.mubr.bf16.mxu0 0
    %280 = vmatmul.mubr.bf16.gmra.mrb[0].mxu0 %v170
    %v281 = vpop.f32.mrb[0].mxu0
    %v282 = vadd.f32 0.0, %v281
    %v283 = vpop.f32.mrb[0].mxu0
    %v284 = vpop.f32.mrb[0].mxu0
    %v285 = vadd.f32 0.0, %v284
    %v286 = vpop.f32.mrb[0].mxu0
    %287 = vdwg.mxu0
    %v288 = vpack.c.bf16 %v261, %v258
    %v289 = vpack.c.bf16 %v269, %v266
    %v290 = vpack.c.bf16 %v277, %v274
    %v291 = vpack.c.bf16 %v285, %v282
    %v292 = vld [vmem:[%s3] sm:$0x1]
    %v294 = vlaneseq
    %v295 = vshrl.u32 %v294, 7
    %v296 = vsub.s32 0, %v295
    %v297 = vrot.slane %v292, %v296
    %v307 = vunpack.c.l.b16 %v119
    %v308 = vunpack.c.l.b16 %v120
    %v309 = vunpack.c.l.b16 %v121
    %v310 = vunpack.c.l.b16 %v122
    %v311 = vunpack.c.l.b16 %v123
    %v312 = vunpack.c.l.b16 %v124
    %v313 = vunpack.c.l.b16 %v125
    %v314 = vunpack.c.l.b16 %v126
    %v315 = vpack.c.b16 %v308, %v307
    %v316 = vpack.c.b16 %v310, %v309
    %v317 = vpack.c.b16 %v312, %v311
    %v318 = vpack.c.b16 %v314, %v313
    %vm319 = vcmask 523264
    %v321 = vsel %vm319, %v315, 0
    %v324 = vsel %vm319, %v316, 0
    %v327 = vsel %vm319, %v317, 0
    %v330 = vsel %vm319, %v318, 0
    %332 = vmatprep.subr.bf16.mxu0 0
    %333 = vmatpush1.bf16.msra.mxu0 %v288
    %334 = vmatprep.subr.bf16.mxu0 0
    %335 = vmatpush1.bf16.msra.mxu0 %v289
    %336 = vmatprep.subr.bf16.mxu0 0
    %337 = vmatpush1.bf16.msra.mxu0 %v290
    %338 = vmatprep.subr.bf16.mxu0 0
    %339 = vmatpush1.bf16.msra.mxu0 %v291
    %340 = vmatprep.subr.bf16.mxu0 0
    %341 = vmatpush1.bf16.msra.mxu0 0
    %342 = vmatprep.subr.bf16.mxu0 0
    %343 = vmatpush1.bf16.msra.mxu0 0
    %344 = vmatprep.subr.bf16.mxu0 0
    %345 = vmatpush1.bf16.msra.mxu0 0
    %346 = vmatprep.subr.bf16.mxu0 0
    %347 = vmatpush1.bf16.msra.mxu0 0
    %348 = vmatprep.subr.bf16.mxu0 0
    %349 = vmatpush1.bf16.msra.mxu0 0
    %350 = vmatprep.subr.bf16.mxu0 0
    %351 = vmatpush1.bf16.msra.mxu0 0
    %352 = vmatprep.subr.bf16.mxu0 0
    %353 = vmatpush1.bf16.msra.mxu0 0
    %354 = vmatprep.subr.bf16.mxu0 0
    %355 = vmatpush1.bf16.msra.mxu0 0
    %356 = vmatprep.subr.bf16.mxu0 0
    %357 = vmatpush1.bf16.msra.mxu0 0
    %358 = vmatprep.subr.bf16.mxu0 0
    %359 = vmatpush1.bf16.msra.mxu0 0
    %360 = vmatprep.subr.bf16.mxu0 0
    %361 = vmatpush1.bf16.msra.mxu0 0
    %362 = vmatprep.subr.bf16.mxu0 0
    %363 = vmatpush1.bf16.msra.mxu0 0
    %364 = vmatprep.mubr.bf16.mxu0 0
    %365 = vmatmul.mubr.bf16.gmra.mrb[0].mxu0 %v321
    %v366 = vpop.f32.mrb[0].mxu0
    %v367 = vadd.f32 %v297, %v366
    %v368 = vpop.f32.mrb[0].mxu0
    %v369 = vpop.f32.mrb[0].mxu0
    %v370 = vadd.f32 %v297, %v369
    %v371 = vpop.f32.mrb[0].mxu0
    %372 = vmatprep.mubr.bf16.mxu0 0
    %373 = vmatmul.mubr.bf16.gmra.mrb[0].mxu0 %v324
    %v374 = vpop.f32.mrb[0].mxu0
    %v375 = vadd.f32 %v297, %v374
    %v376 = vpop.f32.mrb[0].mxu0
    %v377 = vpop.f32.mrb[0].mxu0
    %v378 = vadd.f32 %v297, %v377
    %v379 = vpop.f32.mrb[0].mxu0
    %380 = vmatprep.mubr.bf16.mxu0 0
    %381 = vmatmul.mubr.bf16.gmra.mrb[0].mxu0 %v327
    %v382 = vpop.f32.mrb[0].mxu0
    %v383 = vadd.f32 %v297, %v382
    %v384 = vpop.f32.mrb[0].mxu0
    %v385 = vpop.f32.mrb[0].mxu0
    %v386 = vadd.f32 %v297, %v385
    %v387 = vpop.f32.mrb[0].mxu0
    %388 = vmatprep.mubr.bf16.mxu0 0
    %389 = vmatmul.mubr.bf16.gmra.mrb[0].mxu0 %v330
    %v390 = vpop.f32.mrb[0].mxu0
    %v391 = vadd.f32 %v297, %v390
    %v392 = vpop.f32.mrb[0].mxu0
    %v393 = vpop.f32.mrb[0].mxu0
    %v394 = vadd.f32 %v297, %v393
    %v395 = vpop.f32.mrb[0].mxu0
    %396 = vdwg.mxu0
    %v397 = vmax.f32 %v367, 0.0
    %v398 = vmax.f32 %v370, 0.0
    %v399 = vmax.f32 %v375, 0.0
    %v400 = vmax.f32 %v378, 0.0
    %v401 = vmax.f32 %v383, 0.0
    %v402 = vmax.f32 %v386, 0.0
    %v403 = vmax.f32 %v391, 0.0
    %v404 = vmax.f32 %v394, 0.0
    %v405 = vpack.c.bf16 %v398, %v397
    %v406 = vpack.c.bf16 %v400, %v399
    %v407 = vpack.c.bf16 %v402, %v401
    %v408 = vpack.c.bf16 %v404, %v403
    %v409 = vld [vmem:[#allocation8] sm:$0xf]
    %v410 = vld [vmem:[#allocation8 + $0x4] sm:$0xf]
    %v411 = vld [vmem:[#allocation8 + $0x8] sm:$0xf]
    %v412 = vld [vmem:[#allocation8 + $0xc] sm:$0xf]
    %v413 = vld [vmem:[#allocation8 + $0x10] sm:$0xf]
    %v414 = vld [vmem:[#allocation8 + $0x14] sm:$0xf]
    %v415 = vld [vmem:[#allocation8 + $0x18] sm:$0xf]
    %v416 = vld [vmem:[#allocation8 + $0x1c] sm:$0xf]
    %v417 = vld [vmem:[#allocation8 + $0x20] sm:$0xf]
    %v418 = vld [vmem:[#allocation8 + $0x24] sm:$0xf]
    %v419 = vld [vmem:[#allocation8 + $0x28] sm:$0xf]
    %v420 = vld [vmem:[#allocation8 + $0x2c] sm:$0xf]
    %v421 = vld [vmem:[#allocation8 + $0x30] sm:$0xf]
    %v422 = vld [vmem:[#allocation8 + $0x34] sm:$0xf]
    %v423 = vld [vmem:[#allocation8 + $0x38] sm:$0xf]
    %v424 = vld [vmem:[#allocation8 + $0x3c] sm:$0xf]
    %v441 = vunpack.c.l.b16 %v409
    %v442 = vunpack.c.l.b16 %v410
    %v443 = vunpack.c.l.b16 %v411
    %v444 = vunpack.c.l.b16 %v412
    %v445 = vunpack.c.l.b16 %v413
    %v446 = vunpack.c.l.b16 %v414
    %v447 = vunpack.c.l.b16 %v415
    %v448 = vunpack.c.l.b16 %v416
    %v449 = vunpack.c.l.b16 %v417
    %v450 = vunpack.c.l.b16 %v418
    %v451 = vunpack.c.l.b16 %v419
    %v452 = vunpack.c.l.b16 %v420
    %v453 = vunpack.c.l.b16 %v421
    %v454 = vunpack.c.l.b16 %v422
    %v455 = vunpack.c.l.b16 %v423
    %v456 = vunpack.c.l.b16 %v424
    %v457 = vpack.c.b16 %v442, %v441
    %v458 = vpack.c.b16 %v444, %v443
    %v459 = vpack.c.b16 %v446, %v445
    %v460 = vpack.c.b16 %v448, %v447
    %v461 = vpack.c.b16 %v450, %v449
    %v462 = vpack.c.b16 %v452, %v451
    %v463 = vpack.c.b16 %v454, %v453
    %v464 = vpack.c.b16 %v456, %v455
    %473 = vmatprep.subr.bf16.mxu0 0
    %474 = vmatpush1.bf16.msra.mxu0 %v457
    %475 = vmatprep.subr.bf16.mxu0 0
    %476 = vmatpush1.bf16.msra.mxu0 %v458
    %477 = vmatprep.subr.bf16.mxu0 0
    %478 = vmatpush1.bf16.msra.mxu0 %v459
    %479 = vmatprep.subr.bf16.mxu0 0
    %480 = vmatpush1.bf16.msra.mxu0 %v460
    %481 = vmatprep.subr.bf16.mxu0 0
    %482 = vmatpush1.bf16.msra.mxu0 %v461
    %483 = vmatprep.subr.bf16.mxu0 0
    %484 = vmatpush1.bf16.msra.mxu0 %v462
    %485 = vmatprep.subr.bf16.mxu0 0
    %486 = vmatpush1.bf16.msra.mxu0 %v463
    %487 = vmatprep.subr.bf16.mxu0 0
    %488 = vmatpush1.bf16.msra.mxu0 %v464
    %489 = vmatprep.subr.bf16.mxu0 0
    %490 = vmatpush1.bf16.msra.mxu0 0
    %491 = vmatprep.subr.bf16.mxu0 0
    %492 = vmatpush1.bf16.msra.mxu0 0
    %493 = vmatprep.subr.bf16.mxu0 0
    %494 = vmatpush1.bf16.msra.mxu0 0
    %495 = vmatprep.subr.bf16.mxu0 0
    %496 = vmatpush1.bf16.msra.mxu0 0
    %497 = vmatprep.subr.bf16.mxu0 0
    %498 = vmatpush1.bf16.msra.mxu0 0
    %499 = vmatprep.subr.bf16.mxu0 0
    %500 = vmatpush1.bf16.msra.mxu0 0
    %501 = vmatprep.subr.bf16.mxu0 0
    %502 = vmatpush1.bf16.msra.mxu0 0
    %503 = vmatprep.subr.bf16.mxu0 0
    %504 = vmatpush1.bf16.msra.mxu0 0
    %505 = vmatprep.mubr.bf16.mxu0 0
    %506 = vmatmul.mubr.bf16.gmra.mrb[0].mxu0 %v405
    %v507 = vpop.f32.mrb[0].mxu0
    %v508 = vadd.f32 0.0, %v507
    %v509 = vpop.f32.mrb[0].mxu0
    %v510 = vpop.f32.mrb[0].mxu0
    %v511 = vadd.f32 0.0, %v510
    %v512 = vpop.f32.mrb[0].mxu0
    %513 = vmatprep.mubr.bf16.mxu0 0
    %514 = vmatmul.mubr.bf16.gmra.mrb[0].mxu0 %v406
    %v515 = vpop.f32.mrb[0].mxu0
    %v516 = vadd.f32 0.0, %v515
    %v517 = vpop.f32.mrb[0].mxu0
    %v518 = vpop.f32.mrb[0].mxu0
    %v519 = vadd.f32 0.0, %v518
    %v520 = vpop.f32.mrb[0].mxu0
    %521 = vmatprep.mubr.bf16.mxu0 0
    %522 = vmatmul.mubr.bf16.gmra.mrb[0].mxu0 %v407
    %v523 = vpop.f32.mrb[0].mxu0
    %v524 = vadd.f32 0.0, %v523
    %v525 = vpop.f32.mrb[0].mxu0
    %v526 = vpop.f32.mrb[0].mxu0
    %v527 = vadd.f32 0.0, %v526
    %v528 = vpop.f32.mrb[0].mxu0
    %529 = vmatprep.mubr.bf16.mxu0 0
    %530 = vmatmul.mubr.bf16.gmra.mrb[0].mxu0 %v408
    %v531 = vpop.f32.mrb[0].mxu0
    %v532 = vadd.f32 0.0, %v531
    %v533 = vpop.f32.mrb[0].mxu0
    %v534 = vpop.f32.mrb[0].mxu0
    %v535 = vadd.f32 0.0, %v534
    %v536 = vpop.f32.mrb[0].mxu0
    %537 = vdwg.mxu0
    %v538 = vpack.c.bf16 %v511, %v508
    %v539 = vpack.c.bf16 %v519, %v516
    %v540 = vpack.c.bf16 %v527, %v524
    %v541 = vpack.c.bf16 %v535, %v532
    %v542 = vld [vmem:[%s5] sm:$0x1]
    %v544 = vlaneseq
    %v545 = vshrl.u32 %v544, 7
    %v546 = vsub.s32 0, %v545
    %v547 = vrot.slane %v542, %v546
    %549 = vmatprep.subr.bf16.mxu0 0
    %550 = vmatpush1.bf16.msra.mxu0 %v538
    %551 = vmatprep.subr.bf16.mxu0 0
    %552 = vmatpush1.bf16.msra.mxu0 %v539
    %553 = vmatprep.subr.bf16.mxu0 0
    %554 = vmatpush1.bf16.msra.mxu0 %v540
    %555 = vmatprep.subr.bf16.mxu0 0
    %556 = vmatpush1.bf16.msra.mxu0 %v541
    %557 = vmatprep.subr.bf16.mxu0 0
    %558 = vmatpush1.bf16.msra.mxu0 0
    %559 = vmatprep.subr.bf16.mxu0 0
    %560 = vmatpush1.bf16.msra.mxu0 0
    %561 = vmatprep.subr.bf16.mxu0 0
    %562 = vmatpush1.bf16.msra.mxu0 0
    %563 = vmatprep.subr.bf16.mxu0 0
    %564 = vmatpush1.bf16.msra.mxu0 0
    %565 = vmatprep.subr.bf16.mxu0 0
    %566 = vmatpush1.bf16.msra.mxu0 0
    %567 = vmatprep.subr.bf16.mxu0 0
    %568 = vmatpush1.bf16.msra.mxu0 0
    %569 = vmatprep.subr.bf16.mxu0 0
    %570 = vmatpush1.bf16.msra.mxu0 0
    %571 = vmatprep.subr.bf16.mxu0 0
    %572 = vmatpush1.bf16.msra.mxu0 0
    %573 = vmatprep.subr.bf16.mxu0 0
    %574 = vmatpush1.bf16.msra.mxu0 0
    %575 = vmatprep.subr.bf16.mxu0 0
    %576 = vmatpush1.bf16.msra.mxu0 0
    %577 = vmatprep.subr.bf16.mxu0 0
    %578 = vmatpush1.bf16.msra.mxu0 0
    %579 = vmatprep.subr.bf16.mxu0 0
    %580 = vmatpush1.bf16.msra.mxu0 0
    %581 = vmatprep.mubr.bf16.mxu0 0
    %582 = vmatmul.mubr.bf16.gmra.mrb[0].mxu0 %v321
    %v583 = vpop.f32.mrb[0].mxu0
    %v584 = vadd.f32 %v547, %v583
    %v585 = vpop.f32.mrb[0].mxu0
    %v586 = vpop.f32.mrb[0].mxu0
    %v587 = vadd.f32 %v547, %v586
    %v588 = vpop.f32.mrb[0].mxu0
    %589 = vmatprep.mubr.bf16.mxu0 0
    %590 = vmatmul.mubr.bf16.gmra.mrb[0].mxu0 %v324
    %v591 = vpop.f32.mrb[0].mxu0
    %v592 = vadd.f32 %v547, %v591
    %v593 = vpop.f32.mrb[0].mxu0
    %v594 = vpop.f32.mrb[0].mxu0
    %v595 = vadd.f32 %v547, %v594
    %v596 = vpop.f32.mrb[0].mxu0
    %597 = vmatprep.mubr.bf16.mxu0 0
    %598 = vmatmul.mubr.bf16.gmra.mrb[0].mxu0 %v327
    %v599 = vpop.f32.mrb[0].mxu0
    %v600 = vadd.f32 %v547, %v599
    %v601 = vpop.f32.mrb[0].mxu0
    %v602 = vpop.f32.mrb[0].mxu0
    %v603 = vadd.f32 %v547, %v602
    %v604 = vpop.f32.mrb[0].mxu0
    %605 = vmatprep.mubr.bf16.mxu0 0
    %606 = vmatmul.mubr.bf16.gmra.mrb[0].mxu0 %v330
    %v607 = vpop.f32.mrb[0].mxu0
    %v608 = vadd.f32 %v547, %v607
    %v609 = vpop.f32.mrb[0].mxu0
    %v610 = vpop.f32.mrb[0].mxu0
    %v611 = vadd.f32 %v547, %v610
    %v612 = vpop.f32.mrb[0].mxu0
    %613 = vdwg.mxu0
    %v614 = vmax.f32 %v584, 0.0
    %v615 = vmax.f32 %v587, 0.0
    %v616 = vmax.f32 %v592, 0.0
    %v617 = vmax.f32 %v595, 0.0
    %v618 = vmax.f32 %v600, 0.0
    %v619 = vmax.f32 %v603, 0.0
    %v620 = vmax.f32 %v608, 0.0
    %v621 = vmax.f32 %v611, 0.0
    %v622 = vadd.f32 %v614, %v397
    %v623 = vadd.f32 %v615, %v398
    %v624 = vadd.f32 %v616, %v399
    %v625 = vadd.f32 %v617, %v400
    %v626 = vadd.f32 %v618, %v401
    %v627 = vadd.f32 %v619, %v402
    %v628 = vadd.f32 %v620, %v403
    %v629 = vadd.f32 %v621, %v404
    %v630 = vpack.c.bf16 %v623, %v622
    %v631 = vpack.c.bf16 %v625, %v624
    %v632 = vpack.c.bf16 %v627, %v626
    %v633 = vpack.c.bf16 %v629, %v628
    %v634 = vld [vmem:[#allocation10] sm:$0xf]
    %v635 = vld [vmem:[#allocation10 + $0x4] sm:$0xf]
    %v636 = vld [vmem:[#allocation10 + $0x8] sm:$0xf]
    %v637 = vld [vmem:[#allocation10 + $0xc] sm:$0xf]
    %v638 = vld [vmem:[#allocation10 + $0x10] sm:$0xf]
    %v639 = vld [vmem:[#allocation10 + $0x14] sm:$0xf]
    %v640 = vld [vmem:[#allocation10 + $0x18] sm:$0xf]
    %v641 = vld [vmem:[#allocation10 + $0x1c] sm:$0xf]
    %v642 = vld [vmem:[#allocation10 + $0x20] sm:$0xf]
    %v643 = vld [vmem:[#allocation10 + $0x24] sm:$0xf]
    %v644 = vld [vmem:[#allocation10 + $0x28] sm:$0xf]
    %v645 = vld [vmem:[#allocation10 + $0x2c] sm:$0xf]
    %v646 = vld [vmem:[#allocation10 + $0x30] sm:$0xf]
    %v647 = vld [vmem:[#allocation10 + $0x34] sm:$0xf]
    %v648 = vld [vmem:[#allocation10 + $0x38] sm:$0xf]
    %v649 = vld [vmem:[#allocation10 + $0x3c] sm:$0xf]
    %v666 = vunpack.c.l.b16 %v634
    %v667 = vunpack.c.l.b16 %v635
    %v668 = vunpack.c.l.b16 %v636
    %v669 = vunpack.c.l.b16 %v637
    %v670 = vunpack.c.l.b16 %v638
    %v671 = vunpack.c.l.b16 %v639
    %v672 = vunpack.c.l.b16 %v640
    %v673 = vunpack.c.l.b16 %v641
    %v674 = vunpack.c.l.b16 %v642
    %v675 = vunpack.c.l.b16 %v643
    %v676 = vunpack.c.l.b16 %v644
    %v677 = vunpack.c.l.b16 %v645
    %v678 = vunpack.c.l.b16 %v646
    %v679 = vunpack.c.l.b16 %v647
    %v680 = vunpack.c.l.b16 %v648
    %v681 = vunpack.c.l.b16 %v649
    %v682 = vpack.c.b16 %v667, %v666
    %v683 = vpack.c.b16 %v669, %v668
    %v684 = vpack.c.b16 %v671, %v670
    %v685 = vpack.c.b16 %v673, %v672
    %v686 = vpack.c.b16 %v675, %v674
    %v687 = vpack.c.b16 %v677, %v676
    %v688 = vpack.c.b16 %v679, %v678
    %v689 = vpack.c.b16 %v681, %v680
    %698 = vmatprep.subr.bf16.mxu0 0
    %699 = vmatpush1.bf16.msra.mxu0 %v682
    %700 = vmatprep.subr.bf16.mxu0 0
    %701 = vmatpush1.bf16.msra.mxu0 %v683
    %702 = vmatprep.subr.bf16.mxu0 0
    %703 = vmatpush1.bf16.msra.mxu0 %v684
    %704 = vmatprep.subr.bf16.mxu0 0
    %705 = vmatpush1.bf16.msra.mxu0 %v685
    %706 = vmatprep.subr.bf16.mxu0 0
    %707 = vmatpush1.bf16.msra.mxu0 %v686
    %708 = vmatprep.subr.bf16.mxu0 0
    %709 = vmatpush1.bf16.msra.mxu0 %v687
    %710 = vmatprep.subr.bf16.mxu0 0
    %711 = vmatpush1.bf16.msra.mxu0 %v688
    %712 = vmatprep.subr.bf16.mxu0 0
    %713 = vmatpush1.bf16.msra.mxu0 %v689
    %714 = vmatprep.subr.bf16.mxu0 0
    %715 = vmatpush1.bf16.msra.mxu0 0
    %716 = vmatprep.subr.bf16.mxu0 0
    %717 = vmatpush1.bf16.msra.mxu0 0
    %718 = vmatprep.subr.bf16.mxu0 0
    %719 = vmatpush1.bf16.msra.mxu0 0
    %720 = vmatprep.subr.bf16.mxu0 0
    %721 = vmatpush1.bf16.msra.mxu0 0
    %722 = vmatprep.subr.bf16.mxu0 0
    %723 = vmatpush1.bf16.msra.mxu0 0
    %724 = vmatprep.subr.bf16.mxu0 0
    %725 = vmatpush1.bf16.msra.mxu0 0
    %726 = vmatprep.subr.bf16.mxu0 0
    %727 = vmatpush1.bf16.msra.mxu0 0
    %728 = vmatprep.subr.bf16.mxu0 0
    %729 = vmatpush1.bf16.msra.mxu0 0
    %730 = vmatprep.mubr.bf16.mxu0 0
    %731 = vmatmul.mubr.bf16.gmra.mrb[0].mxu0 %v630
    %v732 = vpop.f32.mrb[0].mxu0
    %v733 = vadd.f32 0.0, %v732
    %v734 = vpop.f32.mrb[0].mxu0
    %v735 = vpop.f32.mrb[0].mxu0
    %v736 = vadd.f32 0.0, %v735
    %v737 = vpop.f32.mrb[0].mxu0
    %738 = vmatprep.mubr.bf16.mxu0 0
    %739 = vmatmul.mubr.bf16.gmra.mrb[0].mxu0 %v631
    %v740 = vpop.f32.mrb[0].mxu0
    %v741 = vadd.f32 0.0, %v740
    %v742 = vpop.f32.mrb[0].mxu0
    %v743 = vpop.f32.mrb[0].mxu0
    %v744 = vadd.f32 0.0, %v743
    %v745 = vpop.f32.mrb[0].mxu0
    %746 = vmatprep.mubr.bf16.mxu0 0
    %747 = vmatmul.mubr.bf16.gmra.mrb[0].mxu0 %v632
    %v748 = vpop.f32.mrb[0].mxu0
    %v749 = vadd.f32 0.0, %v748
    %v750 = vpop.f32.mrb[0].mxu0
    %v751 = vpop.f32.mrb[0].mxu0
    %v752 = vadd.f32 0.0, %v751
    %v753 = vpop.f32.mrb[0].mxu0
    %754 = vmatprep.mubr.bf16.mxu0 0
    %755 = vmatmul.mubr.bf16.gmra.mrb[0].mxu0 %v633
    %v756 = vpop.f32.mrb[0].mxu0
    %v757 = vadd.f32 0.0, %v756
    %v758 = vpop.f32.mrb[0].mxu0
    %v759 = vpop.f32.mrb[0].mxu0
    %v760 = vadd.f32 0.0, %v759
    %v761 = vpop.f32.mrb[0].mxu0
    %762 = vdwg.mxu0
    %v763 = vpack.c.bf16 %v736, %v733
    %v764 = vpack.c.bf16 %v744, %v741
    %v765 = vpack.c.bf16 %v752, %v749
    %v766 = vpack.c.bf16 %v760, %v757
    %v767 = vld [vmem:[%s7] sm:$0x1]
    %v769 = vlaneseq
    %v770 = vshrl.u32 %v769, 7
    %v771 = vsub.s32 0, %v770
    %v772 = vrot.slane %v767, %v771
    %774 = vmatprep.subr.bf16.mxu0 0
    %775 = vmatpush1.bf16.msra.mxu0 %v763
    %776 = vmatprep.subr.bf16.mxu0 0
    %777 = vmatpush1.bf16.msra.mxu0 %v764
    %778 = vmatprep.subr.bf16.mxu0 0
    %779 = vmatpush1.bf16.msra.mxu0 %v765
    %780 = vmatprep.subr.bf16.mxu0 0
    %781 = vmatpush1.bf16.msra.mxu0 %v766
    %782 = vmatprep.subr.bf16.mxu0 0
    %783 = vmatpush1.bf16.msra.mxu0 0
    %784 = vmatprep.subr.bf16.mxu0 0
    %785 = vmatpush1.bf16.msra.mxu0 0
    %786 = vmatprep.subr.bf16.mxu0 0
    %787 = vmatpush1.bf16.msra.mxu0 0
    %788 = vmatprep.subr.bf16.mxu0 0
    %789 = vmatpush1.bf16.msra.mxu0 0
    %790 = vmatprep.subr.bf16.mxu0 0
    %791 = vmatpush1.bf16.msra.mxu0 0
    %792 = vmatprep.subr.bf16.mxu0 0
    %793 = vmatpush1.bf16.msra.mxu0 0
    %794 = vmatprep.subr.bf16.mxu0 0
    %795 = vmatpush1.bf16.msra.mxu0 0
    %796 = vmatprep.subr.bf16.mxu0 0
    %797 = vmatpush1.bf16.msra.mxu0 0
    %798 = vmatprep.subr.bf16.mxu0 0
    %799 = vmatpush1.bf16.msra.mxu0 0
    %800 = vmatprep.subr.bf16.mxu0 0
    %801 = vmatpush1.bf16.msra.mxu0 0
    %802 = vmatprep.subr.bf16.mxu0 0
    %803 = vmatpush1.bf16.msra.mxu0 0
    %804 = vmatprep.subr.bf16.mxu0 0
    %805 = vmatpush1.bf16.msra.mxu0 0
    %806 = vmatprep.mubr.bf16.mxu0 0
    %807 = vmatmul.mubr.bf16.gmra.mrb[0].mxu0 %v321
    %v808 = vpop.f32.mrb[0].mxu0
    %v809 = vadd.f32 %v772, %v808
    %v810 = vpop.f32.mrb[0].mxu0
    %v811 = vpop.f32.mrb[0].mxu0
    %v812 = vadd.f32 %v772, %v811
    %v813 = vpop.f32.mrb[0].mxu0
    %814 = vmatprep.mubr.bf16.mxu0 0
    %815 = vmatmul.mubr.bf16.gmra.mrb[0].mxu0 %v324
    %v816 = vpop.f32.mrb[0].mxu0
    %v817 = vadd.f32 %v772, %v816
    %v818 = vpop.f32.mrb[0].mxu0
    %v819 = vpop.f32.mrb[0].mxu0
    %v820 = vadd.f32 %v772, %v819
    %v821 = vpop.f32.mrb[0].mxu0
    %822 = vmatprep.mubr.bf16.mxu0 0
    %823 = vmatmul.mubr.bf16.gmra.mrb[0].mxu0 %v327
    %v824 = vpop.f32.mrb[0].mxu0
    %v825 = vadd.f32 %v772, %v824
    %v826 = vpop.f32.mrb[0].mxu0
    %v827 = vpop.f32.mrb[0].mxu0
    %v828 = vadd.f32 %v772, %v827
    %v829 = vpop.f32.mrb[0].mxu0
    %830 = vmatprep.mubr.bf16.mxu0 0
    %831 = vmatmul.mubr.bf16.gmra.mrb[0].mxu0 %v330
    %v832 = vpop.f32.mrb[0].mxu0
    %v833 = vadd.f32 %v772, %v832
    %v834 = vpop.f32.mrb[0].mxu0
    %v835 = vpop.f32.mrb[0].mxu0
    %v836 = vadd.f32 %v772, %v835
    %v837 = vpop.f32.mrb[0].mxu0
    %838 = vdwg.mxu0
    %v839 = vmax.f32 %v809, 0.0
    %v840 = vmax.f32 %v812, 0.0
    %v841 = vmax.f32 %v817, 0.0
    %v842 = vmax.f32 %v820, 0.0
    %v843 = vmax.f32 %v825, 0.0
    %v844 = vmax.f32 %v828, 0.0
    %v845 = vmax.f32 %v833, 0.0
    %v846 = vmax.f32 %v836, 0.0
    %v847 = vadd.f32 %v839, %v622
    %v848 = vadd.f32 %v840, %v623
    %v849 = vadd.f32 %v841, %v624
    %v850 = vadd.f32 %v842, %v625
    %v851 = vadd.f32 %v843, %v626
    %v852 = vadd.f32 %v844, %v627
    %v853 = vadd.f32 %v845, %v628
    %v854 = vadd.f32 %v846, %v629
    %v855 = vpack.c.bf16 %v848, %v847
    %v856 = vpack.c.bf16 %v850, %v849
    %v857 = vpack.c.bf16 %v852, %v851
    %v858 = vpack.c.bf16 %v854, %v853
    %v859 = vld [vmem:[#allocation11] sm:$0xf]
    %v860 = vld [vmem:[#allocation11 + $0x4] sm:$0xf]
    %v861 = vld [vmem:[#allocation11 + $0x8] sm:$0xf]
    %v862 = vld [vmem:[#allocation11 + $0xc] sm:$0xf]
    %v863 = vld [vmem:[#allocation11 + $0x10] sm:$0xf]
    %v864 = vld [vmem:[#allocation11 + $0x14] sm:$0xf]
    %v865 = vld [vmem:[#allocation11 + $0x18] sm:$0xf]
    %v866 = vld [vmem:[#allocation11 + $0x1c] sm:$0xf]
    %v867 = vld [vmem:[#allocation11 + $0x20] sm:$0xf]
    %v868 = vld [vmem:[#allocation11 + $0x24] sm:$0xf]
    %v869 = vld [vmem:[#allocation11 + $0x28] sm:$0xf]
    %v870 = vld [vmem:[#allocation11 + $0x2c] sm:$0xf]
    %v871 = vld [vmem:[#allocation11 + $0x30] sm:$0xf]
    %v872 = vld [vmem:[#allocation11 + $0x34] sm:$0xf]
    %v873 = vld [vmem:[#allocation11 + $0x38] sm:$0xf]
    %v874 = vld [vmem:[#allocation11 + $0x3c] sm:$0xf]
    %v891 = vunpack.c.l.b16 %v859
    %v892 = vunpack.c.l.b16 %v860
    %v893 = vunpack.c.l.b16 %v861
    %v894 = vunpack.c.l.b16 %v862
    %v895 = vunpack.c.l.b16 %v863
    %v896 = vunpack.c.l.b16 %v864
    %v897 = vunpack.c.l.b16 %v865
    %v898 = vunpack.c.l.b16 %v866
    %v899 = vunpack.c.l.b16 %v867
    %v900 = vunpack.c.l.b16 %v868
    %v901 = vunpack.c.l.b16 %v869
    %v902 = vunpack.c.l.b16 %v870
    %v903 = vunpack.c.l.b16 %v871
    %v904 = vunpack.c.l.b16 %v872
    %v905 = vunpack.c.l.b16 %v873
    %v906 = vunpack.c.l.b16 %v874
    %v907 = vpack.c.b16 %v892, %v891
    %v908 = vpack.c.b16 %v894, %v893
    %v909 = vpack.c.b16 %v896, %v895
    %v910 = vpack.c.b16 %v898, %v897
    %v911 = vpack.c.b16 %v900, %v899
    %v912 = vpack.c.b16 %v902, %v901
    %v913 = vpack.c.b16 %v904, %v903
    %v914 = vpack.c.b16 %v906, %v905
    %923 = vmatprep.subr.bf16.mxu0 0
    %924 = vmatpush1.bf16.msra.mxu0 %v907
    %925 = vmatprep.subr.bf16.mxu0 0
    %926 = vmatpush1.bf16.msra.mxu0 %v908
    %927 = vmatprep.subr.bf16.mxu0 0
    %928 = vmatpush1.bf16.msra.mxu0 %v909
    %929 = vmatprep.subr.bf16.mxu0 0
    %930 = vmatpush1.bf16.msra.mxu0 %v910
    %931 = vmatprep.subr.bf16.mxu0 0
    %932 = vmatpush1.bf16.msra.mxu0 %v911
    %933 = vmatprep.subr.bf16.mxu0 0
    %934 = vmatpush1.bf16.msra.mxu0 %v912
    %935 = vmatprep.subr.bf16.mxu0 0
    %936 = vmatpush1.bf16.msra.mxu0 %v913
    %937 = vmatprep.subr.bf16.mxu0 0
    %938 = vmatpush1.bf16.msra.mxu0 %v914
    %939 = vmatprep.subr.bf16.mxu0 0
    %940 = vmatpush1.bf16.msra.mxu0 0
    %941 = vmatprep.subr.bf16.mxu0 0
    %942 = vmatpush1.bf16.msra.mxu0 0
    %943 = vmatprep.subr.bf16.mxu0 0
    %944 = vmatpush1.bf16.msra.mxu0 0
    %945 = vmatprep.subr.bf16.mxu0 0
    %946 = vmatpush1.bf16.msra.mxu0 0
    %947 = vmatprep.subr.bf16.mxu0 0
    %948 = vmatpush1.bf16.msra.mxu0 0
    %949 = vmatprep.subr.bf16.mxu0 0
    %950 = vmatpush1.bf16.msra.mxu0 0
    %951 = vmatprep.subr.bf16.mxu0 0
    %952 = vmatpush1.bf16.msra.mxu0 0
    %953 = vmatprep.subr.bf16.mxu0 0
    %954 = vmatpush1.bf16.msra.mxu0 0
    %955 = vmatprep.mubr.bf16.mxu0 0
    %956 = vmatmul.mubr.bf16.gmra.mrb[0].mxu0 %v855
    %v957 = vpop.f32.mrb[0].mxu0
    %v958 = vadd.f32 0.0, %v957
    %v959 = vpop.f32.mrb[0].mxu0
    %v960 = vpop.f32.mrb[0].mxu0
    %v961 = vadd.f32 0.0, %v960
    %v962 = vpop.f32.mrb[0].mxu0
    %963 = vmatprep.mubr.bf16.mxu0 0
    %964 = vmatmul.mubr.bf16.gmra.mrb[0].mxu0 %v856
    %v965 = vpop.f32.mrb[0].mxu0
    %v966 = vadd.f32 0.0, %v965
    %v967 = vpop.f32.mrb[0].mxu0
    %v968 = vpop.f32.mrb[0].mxu0
    %v969 = vadd.f32 0.0, %v968
    %v970 = vpop.f32.mrb[0].mxu0
    %971 = vmatprep.mubr.bf16.mxu0 0
    %972 = vmatmul.mubr.bf16.gmra.mrb[0].mxu0 %v857
    %v973 = vpop.f32.mrb[0].mxu0
    %v974 = vadd.f32 0.0, %v973
    %v975 = vpop.f32.mrb[0].mxu0
    %v976 = vpop.f32.mrb[0].mxu0
    %v977 = vadd.f32 0.0, %v976
    %v978 = vpop.f32.mrb[0].mxu0
    %979 = vmatprep.mubr.bf16.mxu0 0
    %980 = vmatmul.mubr.bf16.gmra.mrb[0].mxu0 %v858
    %v981 = vpop.f32.mrb[0].mxu0
    %v982 = vadd.f32 0.0, %v981
    %v983 = vpop.f32.mrb[0].mxu0
    %v984 = vpop.f32.mrb[0].mxu0
    %v985 = vadd.f32 0.0, %v984
    %v986 = vpop.f32.mrb[0].mxu0
    %987 = vdwg.mxu0
    %v988 = vpack.c.bf16 %v961, %v958
    %v989 = vpack.c.bf16 %v969, %v966
    %v990 = vpack.c.bf16 %v977, %v974
    %v991 = vpack.c.bf16 %v985, %v982
    %v992 = vld [vmem:[%s9] sm:$0x1]
    %v994 = vlaneseq
    %v995 = vshrl.u32 %v994, 7
    %v996 = vsub.s32 0, %v995
    %v997 = vrot.slane %v992, %v996
    %999 = vmatprep.subr.bf16.mxu0 0
    %1000 = vmatpush1.bf16.msra.mxu0 %v988
    %1001 = vmatprep.subr.bf16.mxu0 0
    %1002 = vmatpush1.bf16.msra.mxu0 %v989
    %1003 = vmatprep.subr.bf16.mxu0 0
    %1004 = vmatpush1.bf16.msra.mxu0 %v990
    %1005 = vmatprep.subr.bf16.mxu0 0
    %1006 = vmatpush1.bf16.msra.mxu0 %v991
    %1007 = vmatprep.subr.bf16.mxu0 0
    %1008 = vmatpush1.bf16.msra.mxu0 0
    %1009 = vmatprep.subr.bf16.mxu0 0
    %1010 = vmatpush1.bf16.msra.mxu0 0
    %1011 = vmatprep.subr.bf16.mxu0 0
    %1012 = vmatpush1.bf16.msra.mxu0 0
    %1013 = vmatprep.subr.bf16.mxu0 0
    %1014 = vmatpush1.bf16.msra.mxu0 0
    %1015 = vmatprep.subr.bf16.mxu0 0
    %1016 = vmatpush1.bf16.msra.mxu0 0
    %1017 = vmatprep.subr.bf16.mxu0 0
    %1018 = vmatpush1.bf16.msra.mxu0 0
    %1019 = vmatprep.subr.bf16.mxu0 0
    %1020 = vmatpush1.bf16.msra.mxu0 0
    %1021 = vmatprep.subr.bf16.mxu0 0
    %1022 = vmatpush1.bf16.msra.mxu0 0
    %1023 = vmatprep.subr.bf16.mxu0 0
    %1024 = vmatpush1.bf16.msra.mxu0 0
    %1025 = vmatprep.subr.bf16.mxu0 0
    %1026 = vmatpush1.bf16.msra.mxu0 0
    %1027 = vmatprep.subr.bf16.mxu0 0
    %1028 = vmatpush1.bf16.msra.mxu0 0
    %1029 = vmatprep.subr.bf16.mxu0 0
    %1030 = vmatpush1.bf16.msra.mxu0 0
    %1031 = vmatprep.mubr.bf16.mxu0 0
    %1032 = vmatmul.mubr.bf16.gmra.mrb[0].mxu0 %v321
    %v1033 = vpop.f32.mrb[0].mxu0
    %v1034 = vadd.f32 %v997, %v1033
    %v1035 = vpop.f32.mrb[0].mxu0
    %v1036 = vpop.f32.mrb[0].mxu0
    %v1037 = vadd.f32 %v997, %v1036
    %v1038 = vpop.f32.mrb[0].mxu0
    %1039 = vmatprep.mubr.bf16.mxu0 0
    %1040 = vmatmul.mubr.bf16.gmra.mrb[0].mxu0 %v324
    %v1041 = vpop.f32.mrb[0].mxu0
    %v1042 = vadd.f32 %v997, %v1041
    %v1043 = vpop.f32.mrb[0].mxu0
    %v1044 = vpop.f32.mrb[0].mxu0
    %v1045 = vadd.f32 %v997, %v1044
    %v1046 = vpop.f32.mrb[0].mxu0
    %1047 = vmatprep.mubr.bf16.mxu0 0
    %1048 = vmatmul.mubr.bf16.gmra.mrb[0].mxu0 %v327
    %v1049 = vpop.f32.mrb[0].mxu0
    %v1050 = vadd.f32 %v997, %v1049
    %v1051 = vpop.f32.mrb[0].mxu0
    %v1052 = vpop.f32.mrb[0].mxu0
    %v1053 = vadd.f32 %v997, %v1052
    %v1054 = vpop.f32.mrb[0].mxu0
    %1055 = vmatprep.mubr.bf16.mxu0 0
    %1056 = vmatmul.mubr.bf16.gmra.mrb[0].mxu0 %v330
    %v1057 = vpop.f32.mrb[0].mxu0
    %v1058 = vadd.f32 %v997, %v1057
    %v1059 = vpop.f32.mrb[0].mxu0
    %v1060 = vpop.f32.mrb[0].mxu0
    %v1061 = vadd.f32 %v997, %v1060
    %v1062 = vpop.f32.mrb[0].mxu0
    %1063 = vdwg.mxu0
    %v1064 = vlaneseq
    %v1065 = vand.u32 %v1064, 127
    %vm1066 = vcmp.lt.s32.totalorder %v1065, 7
    %v1067 = vsel %vm1066, %v1034, -1e+30
    %v1068 = vsel %vm1066, %v1037, -1e+30
    %v1069 = vsel %vm1066, %v1042, -1e+30
    %v1070 = vsel %vm1066, %v1045, -1e+30
    %v1071 = vsel %vm1066, %v1050, -1e+30
    %v1072 = vsel %vm1066, %v1053, -1e+30
    %v1073 = vsel %vm1066, %v1058, -1e+30
    %v1074 = vsel %vm1066, %v1061, -1e+30
    %1075 = vmax.xlane.f32.xlu0 %v1067
    %v1076 = vpop.xlane.xlu0 %1075
    %1077 = vmax.xlane.f32.xlu0 %v1068
    %v1078 = vpop.xlane.xlu0 %1077
    %1079 = vmax.xlane.f32.xlu0 %v1069
    %v1080 = vpop.xlane.xlu0 %1079
    %1081 = vmax.xlane.f32.xlu0 %v1070
    %v1082 = vpop.xlane.xlu0 %1081
    %1083 = vmax.xlane.f32.xlu0 %v1071
    %v1084 = vpop.xlane.xlu0 %1083
    %1085 = vmax.xlane.f32.xlu0 %v1072
    %v1086 = vpop.xlane.xlu0 %1085
    %1087 = vmax.xlane.f32.xlu0 %v1073
    %v1088 = vpop.xlane.xlu0 %1087
    %1089 = vmax.xlane.f32.xlu0 %v1074
    %v1090 = vpop.xlane.xlu0 %1089
    %v1091 = vsub.f32 %v1067, %v1076
    %v1092 = vsub.f32 %v1068, %v1078
    %v1093 = vsub.f32 %v1069, %v1080
    %v1094 = vsub.f32 %v1070, %v1082
    %v1095 = vsub.f32 %v1071, %v1084
    %v1096 = vsub.f32 %v1072, %v1086
    %v1097 = vsub.f32 %v1073, %v1088
    %v1098 = vsub.f32 %v1074, %v1090
    %v1099 = vmul.f32 %v1091, 1.442695
    %v1100 = vpow.pop %v1099
    %v1101 = vmul.f32 %v1092, 1.442695
    %v1102 = vpow.pop %v1101
    %v1103 = vmul.f32 %v1093, 1.442695
    %v1104 = vpow.pop %v1103
    %v1105 = vmul.f32 %v1094, 1.442695
    %v1106 = vpow.pop %v1105
    %v1107 = vmul.f32 %v1095, 1.442695
    %v1108 = vpow.pop %v1107
    %v1109 = vmul.f32 %v1096, 1.442695
    %v1110 = vpow.pop %v1109
    %v1111 = vmul.f32 %v1097, 1.442695
    %v1112 = vpow.pop %v1111
    %v1113 = vmul.f32 %v1098, 1.442695
    %v1114 = vpow.pop %v1113
    %v1115 = vsel %vm1066, %v1100, 0.0
    %v1116 = vsel %vm1066, %v1102, 0.0
    %v1117 = vsel %vm1066, %v1104, 0.0
    %v1118 = vsel %vm1066, %v1106, 0.0
    %v1119 = vsel %vm1066, %v1108, 0.0
    %v1120 = vsel %vm1066, %v1110, 0.0
    %v1121 = vsel %vm1066, %v1112, 0.0
    %v1122 = vsel %vm1066, %v1114, 0.0
    %1123 = vadd.xlane.f32.xlu0 %v1115
    %v1124 = vpop.xlane.xlu0 %1123
    %1125 = vadd.xlane.f32.xlu0 %v1116
    %v1126 = vpop.xlane.xlu0 %1125
    %1127 = vadd.xlane.f32.xlu0 %v1117
    %v1128 = vpop.xlane.xlu0 %1127
    %1129 = vadd.xlane.f32.xlu0 %v1118
    %v1130 = vpop.xlane.xlu0 %1129
    %1131 = vadd.xlane.f32.xlu0 %v1119
    %v1132 = vpop.xlane.xlu0 %1131
    %1133 = vadd.xlane.f32.xlu0 %v1120
    %v1134 = vpop.xlane.xlu0 %1133
    %1135 = vadd.xlane.f32.xlu0 %v1121
    %v1136 = vpop.xlane.xlu0 %1135
    %1137 = vadd.xlane.f32.xlu0 %v1122
    %v1138 = vpop.xlane.xlu0 %1137
    %v1139 = vlog2.pop %v1124
    %v1140 = vmul.f32 %v1139, 0.6931472
    %v1141 = vlog2.pop %v1126
    %v1142 = vmul.f32 %v1141, 0.6931472
    %v1143 = vlog2.pop %v1128
    %v1144 = vmul.f32 %v1143, 0.6931472
    %v1145 = vlog2.pop %v1130
    %v1146 = vmul.f32 %v1145, 0.6931472
    %v1147 = vlog2.pop %v1132
    %v1148 = vmul.f32 %v1147, 0.6931472
    %v1149 = vlog2.pop %v1134
    %v1150 = vmul.f32 %v1149, 0.6931472
    %v1151 = vlog2.pop %v1136
    %v1152 = vmul.f32 %v1151, 0.6931472
    %v1153 = vlog2.pop %v1138
    %v1154 = vmul.f32 %v1153, 0.6931472
    %v1155 = vadd.f32 %v1140, %v1076
    %v1156 = vadd.f32 %v1142, %v1078
    %v1157 = vadd.f32 %v1144, %v1080
    %v1158 = vadd.f32 %v1146, %v1082
    %v1159 = vadd.f32 %v1148, %v1084
    %v1160 = vadd.f32 %v1150, %v1086
    %v1161 = vadd.f32 %v1152, %v1088
    %v1162 = vadd.f32 %v1154, %v1090
    %v1163 = vsub.f32 %v1034, %v1155
    %v1164 = vsub.f32 %v1037, %v1156
    %v1165 = vsub.f32 %v1042, %v1157
    %v1166 = vsub.f32 %v1045, %v1158
    %v1167 = vsub.f32 %v1050, %v1159
    %v1168 = vsub.f32 %v1053, %v1160
    %v1169 = vsub.f32 %v1058, %v1161
    %v1170 = vsub.f32 %v1061, %v1162
    %1171 = vst [vmem:[#allocation13] sm:$0xff] %v1163
    %1172 = vst [vmem:[#allocation13 + $0x8] sm:$0xff] %v1164
    %1173 = vst [vmem:[#allocation13 + $0x10] sm:$0xff] %v1165
    %1174 = vst [vmem:[#allocation13 + $0x18] sm:$0xff] %v1166
    %1175 = vst [vmem:[#allocation13 + $0x20] sm:$0xff] %v1167
    %1176 = vst [vmem:[#allocation13 + $0x28] sm:$0xff] %v1168
    %1177 = vst [vmem:[#allocation13 + $0x30] sm:$0xff] %v1169
    %1178 = vst [vmem:[#allocation13 + $0x38] sm:$0xff] %v1170
    // Predicated region
    $region66: #{tpu_custom_call.1} parent=1 // pred_check
      _
    $region67: #{tpu_custom_call.1} parent=1 // pred_check_branch
      %1180 = sbr.rel (0) target = $region69
    $region68: #{tpu_custom_call.1} parent=1 // pred_region
      %s1182 = ssub.s32 1024, 1024
      %1183 = vsyncadd [#allocation4], %s1182
      %s1184 = sshll.u32 [#allocation13], 4
      %s1185 = int_to_ptr.vmem [resolvable:$true] %s1184
      %1190 = dma.vmem_to_hbm [thread:$0]  %s1185, 1024, %s10, [#allocation4], 128, 128, 8
    $region69: #{tpu_custom_call.1} parent=1 // pred_fallthru
      _
    // Predicated region
    $region70: #{tpu_custom_call.1} parent=1 // pred_check
      _
    $region71: #{tpu_custom_call.1} parent=1 // pred_check_branch
      %1192 = sbr.rel (0) target = $region73
    $region72: #{tpu_custom_call.1} parent=1 // pred_region
      %1193 = dma.done [#allocation4], 1024
    $region73: #{tpu_custom_call.1} parent=1 // pred_fallthru
      _
    %1194 = vsyncpa [#allocation3], 1
    %1195 = vsyncpa [#allocation6], 1
    %1196 = vsyncpa [#allocation9], 1
    %1197 = vsyncpa [#allocation12], 1
    %1198 = vsyncpa [#allocation4], 1

</llo_original>
